<compile_context>
chip_gen: v7x
topology: tpu7x:2x2x1
jax: 0.10.0
libtpu: 0.0.40
codegen_flags: <defaults>
</compile_context>

<pallas_src>
import numpy as np
import jax
import jax.numpy as jnp
from jax.experimental import pallas as pl
from jax.experimental.pallas import tpu as pltpu

_LANES = 128  # bins are padded to the lane width


def _make_ece_kernel(n_bins: int, n_total: int, tile_n: int):
    def kernel(logits_ref, labels_ref, ece_ref, cnt_ref, sconf_ref, sacc_ref):
        pid = pl.program_id(0)

        @pl.when(pid == 0)
        def _init():
            cnt_ref[...] = jnp.zeros_like(cnt_ref)
            sconf_ref[...] = jnp.zeros_like(sconf_ref)
            sacc_ref[...] = jnp.zeros_like(sacc_ref)

        logits = logits_ref[...].astype(jnp.float32)          # (tile_n, C)
        tn, c = logits.shape

        # conf = max softmax prob = 1 / sum(exp(logits - rowmax))  (exp(0) == 1 exactly)
        m = jnp.max(logits, axis=1, keepdims=True)            # (tile_n, 1)
        denom = jnp.sum(jnp.exp(logits - m), axis=1, keepdims=True)
        conf = 1.0 / denom                                     # exact division (bin edges!)

        # first-index argmax of logits (== argmax of softmax)
        lane_c = jax.lax.broadcasted_iota(jnp.int32, logits.shape, 1)
        pred = jnp.min(jnp.where(logits == m, lane_c, c), axis=1, keepdims=True)

        labels = labels_ref[...]                               # (tile_n, 1) int32
        correct = (pred == labels).astype(jnp.float32)         # (tile_n, 1)

        # Mask rows of a ragged last tile (padded region may hold garbage).
        row = jax.lax.broadcasted_iota(jnp.int32, (tn, 1), 0)
        valid = (pid * tile_n + row) < n_total                 # (tile_n, 1) bool
        conf_m = jnp.where(valid, conf, 0.0)
        acc_m = jnp.where(valid, correct, 0.0)

        # One-hot bin membership, bins along the lane axis (padded to 128 lanes).
        # Boundaries b/n_bins reproduce torch.linspace(0, 1, n_bins+1) endpoints
        # exactly (0.0 and 1.0); comparison keeps the (lo, hi] convention.
        lane_b = jax.lax.broadcasted_iota(jnp.int32, (tn, _LANES), 1)
        lane_f = lane_b.astype(jnp.float32)
        lo = lane_f / float(n_bins)
        hi = (lane_f + 1.0) / float(n_bins)
        in_bin = (conf_m > lo) & (conf_m <= hi) & (lane_b < n_bins) & valid
        onehot = in_bin.astype(jnp.float32)                    # (tile_n, 128)

        # Three lane-dense sublane reductions per tile (replaces 45 1-lane passes).
        cnt_ref[...] += jnp.sum(onehot, axis=0, keepdims=True)
        sconf_ref[...] += jnp.sum(onehot * conf_m, axis=0, keepdims=True)
        sacc_ref[...] += jnp.sum(onehot * acc_m, axis=0, keepdims=True)

        @pl.when(pid == pl.num_programs(0) - 1)
        def _finalize():
            cnt = cnt_ref[...]                                 # (1, 128)
            safe = jnp.maximum(cnt, 1.0)
            prop = cnt / float(n_total)
            gap = jnp.abs(sconf_ref[...] / safe - sacc_ref[...] / safe) * prop
            gap = jnp.where(cnt > 0.0, gap, 0.0)
            ece_ref[...] = jnp.reshape(jnp.sum(gap), (1, 1))

    return kernel


def _choose_tile_n(n: int, c: int, itemsize: int) -> int:
    """Pick a batch tile that keeps double-buffered inputs well under VMEM
    (sized for v7x's 64 MiB budget; also fine on v5e/v6e)."""
    if n <= 512:
        return n                       # full-dim block is always layout-legal
    budget = 8 * 1024 * 1024           # per double-buffered logits pair
    t = budget // max(1, 2 * c * itemsize)
    return int(max(8, min(512, (t // 8) * 8)))


def ece_loss(logits: jax.Array, labels: jax.Array, n_bins: int = 15,
             tile_n: int | None = None) -> jax.Array:
    """Pallas implementation of _ECELoss.forward. Returns shape (1,) float32."""
    n, c = logits.shape
    labels2 = labels.reshape(n, 1).astype(jnp.int32)
    if tile_n is None:
        tile_n = _choose_tile_n(n, c, jnp.dtype(logits.dtype).itemsize)
    grid = (pl.cdiv(n, tile_n),)

    kernel = _make_ece_kernel(n_bins, n, tile_n)
    out = pl.pallas_call(
        kernel,
        out_shape=jax.ShapeDtypeStruct((1, 1), jnp.float32),
        grid_spec=pltpu.PrefetchScalarGridSpec(
            num_scalar_prefetch=0,
            grid=grid,
            in_specs=[
                pl.BlockSpec((tile_n, c), lambda i: (i, 0)),   # logits tile
                pl.BlockSpec((tile_n, 1), lambda i: (i, 0)),   # labels tile
            ],
            out_specs=pl.BlockSpec((1, 1), lambda i: (0, 0)),  # resident; written once
            scratch_shapes=[
                pltpu.VMEM((1, _LANES), jnp.float32),          # per-bin count
                pltpu.VMEM((1, _LANES), jnp.float32),          # per-bin sum(conf)
                pltpu.VMEM((1, _LANES), jnp.float32),          # per-bin sum(acc)
            ],
        ),
        compiler_params=pltpu.CompilerParams(
            dimension_semantics=("arbitrary",),
            vmem_limit_bytes=32 * 1024 * 1024,
        ),
    )(logits, labels2)   # native dtype over the DMA; cast to f32 inside the kernel
    return out.reshape(1)


def _ece_reference(logits, labels, n_bins=15):
    """Pure-JAX reference mirroring the PyTorch module."""
    probs = jax.nn.softmax(logits.astype(jnp.float32), axis=1)
    conf = jnp.max(probs, axis=1)
    pred = jnp.argmax(probs, axis=1)
    acc = (pred == labels).astype(jnp.float32)
    bounds = np.linspace(0.0, 1.0, n_bins + 1).astype(np.float32)
    n = conf.shape[0]
    ece = 0.0
    for b in range(n_bins):
        in_bin = (conf > float(bounds[b])) & (conf <= float(bounds[b + 1]))
        inb = in_bin.astype(jnp.float32)
        cnt = jnp.sum(inb)
        prop = cnt / n
        safe = jnp.maximum(cnt, 1.0)
        gap = jnp.abs(jnp.sum(conf * inb) / safe - jnp.sum(acc * inb) / safe) * prop
        ece = ece + jnp.where(cnt > 0, gap, 0.0)
    return jnp.reshape(ece, (1,))


if __name__ == "__main__":
    key = jax.random.PRNGKey(0)
    k_logits, k_labels = jax.random.split(key)

    # Small shapes; tile_n=32 with N=100 exercises the multi-tile accumulator
    # path and the ragged-last-tile masking.
    N, C, N_BINS = 100, 16, 15
    logits = jax.random.normal(k_logits, (N, C), dtype=jnp.float32) * 2.0
    labels = jax.random.randint(k_labels, (N,), 0, C, dtype=jnp.int32)

    out = jax.block_until_ready(ece_loss(logits, labels, n_bins=N_BINS, tile_n=32))
    ref = jax.block_until_ready(_ece_reference(logits, labels, n_bins=N_BINS))

    assert out.shape == (1,)
    assert np.allclose(np.asarray(out), np.asarray(ref), atol=1e-5), (out, ref)

    print("KERNEL_OK")
</pallas_src>

<mosaic_0001>
module attributes {stable_mosaic.version = 11 : i64} {
  func.func @kernel(%arg0: i32, %arg1: memref<32x16xf32, #tpu.memory_space<vmem>>, %arg2: memref<32x1xi32, #tpu.memory_space<vmem>>, %arg3: memref<1x1xf32, #tpu.memory_space<vmem>>, %arg4: memref<1x128xf32, #tpu.memory_space<vmem>>, %arg5: memref<1x128xf32, #tpu.memory_space<vmem>>, %arg6: memref<1x128xf32, #tpu.memory_space<vmem>>) attributes {dimension_semantics = [#tpu.dimension_semantics<arbitrary>], iteration_bounds = array<i64: 4>, scalar_prefetch = 0 : i64, scratch_operands = 3 : i64, tpu.core_type = #tpu.core_type<tc>, window_params = [{transform_indices = @transform_0, window_bounds = array<i64: 32, 16>}, {transform_indices = @transform_1, window_bounds = array<i64: 32, 1>}, {pipeline_mode = #tpu.pipeline_mode<synchronous>, transform_indices = @transform_2, window_bounds = array<i64: 1, 1>}]} {
    %c0_i32 = arith.constant 0 : i32
    %0 = arith.cmpi eq, %arg0, %c0_i32 : i32
    %1 = arith.extui %0 : i1 to i32
    %c0_i32_0 = arith.constant 0 : i32
    %2 = arith.cmpi ne, %1, %c0_i32_0 : i32
    scf.if %2 {
      %cst_28 = arith.constant 0.000000e+00 : f32
      %76 = vector.broadcast %cst_28 : f32 to vector<1x128xf32>
      %c0_29 = arith.constant 0 : index
      %c0_30 = arith.constant 0 : index
      %77 = vector.load %arg4[%c0_29, %c0_30] : memref<1x128xf32, #tpu.memory_space<vmem>>, vector<1x128xf32>
      tpu.vector_store %arg4[%c0_29, %c0_30], %76 {strides = array<i32>} : memref<1x128xf32, #tpu.memory_space<vmem>>, vector<1x128xf32>,
      %cst_31 = arith.constant 0.000000e+00 : f32
      %78 = vector.broadcast %cst_31 : f32 to vector<1x128xf32>
      %c0_32 = arith.constant 0 : index
      %c0_33 = arith.constant 0 : index
      %79 = vector.load %arg5[%c0_32, %c0_33] : memref<1x128xf32, #tpu.memory_space<vmem>>, vector<1x128xf32>
      tpu.vector_store %arg5[%c0_32, %c0_33], %78 {strides = array<i32>} : memref<1x128xf32, #tpu.memory_space<vmem>>, vector<1x128xf32>,
      %cst_34 = arith.constant 0.000000e+00 : f32
      %80 = vector.broadcast %cst_34 : f32 to vector<1x128xf32>
      %c0_35 = arith.constant 0 : index
      %c0_36 = arith.constant 0 : index
      %81 = vector.load %arg6[%c0_35, %c0_36] : memref<1x128xf32, #tpu.memory_space<vmem>>, vector<1x128xf32>
      tpu.vector_store %arg6[%c0_35, %c0_36], %80 {strides = array<i32>} : memref<1x128xf32, #tpu.memory_space<vmem>>, vector<1x128xf32>,
    } else {
    }
    %c0 = arith.constant 0 : index
    %c0_1 = arith.constant 0 : index
    %3 = vector.load %arg1[%c0, %c0_1] : memref<32x16xf32, #tpu.memory_space<vmem>>, vector<32x16xf32>
    %cst = arith.constant dense<0xFF800000> : vector<32xf32>
    %4 = vector.multi_reduction <maximumf>, %3, %cst [1] : vector<32x16xf32> to vector<32xf32>
    %5 = vector.shape_cast %4 : vector<32xf32> to vector<32x1xf32>
    %6 = vector.broadcast %5 : vector<32x1xf32> to vector<32x16xf32>
    %7 = arith.subf %3, %6 : vector<32x16xf32>
    %8 = math.exp %7 : vector<32x16xf32>
    %cst_2 = arith.constant dense<0.000000e+00> : vector<32xf32>
    %9 = vector.multi_reduction <add>, %8, %cst_2 [1] : vector<32x16xf32> to vector<32xf32>
    %10 = vector.shape_cast %9 : vector<32xf32> to vector<32x1xf32>
    %cst_3 = arith.constant 1.000000e+00 : f32
    %11 = vector.broadcast %cst_3 : f32 to vector<32x1xf32>
    %12 = arith.divf %11, %10 : vector<32x1xf32>
    %13 = tpu.iota {dimensions = array<i32: 1>} : vector<32x16xi32>
    %14 = vector.broadcast %5 : vector<32x1xf32> to vector<32x16xf32>
    %15 = arith.cmpf oeq, %3, %14 : vector<32x16xf32>
    %c16_i32 = arith.constant 16 : i32
    %16 = vector.broadcast %c16_i32 : i32 to vector<32x16xi32>
    %17 = arith.select %15, %13, %16 : vector<32x16xi1>, vector<32x16xi32>
    %cst_4 = arith.constant dense<2147483647> : vector<32xi32>
    %18 = vector.multi_reduction <minsi>, %17, %cst_4 [1] : vector<32x16xi32> to vector<32xi32>
    %19 = vector.shape_cast %18 : vector<32xi32> to vector<32x1xi32>
    %c0_5 = arith.constant 0 : index
    %c0_6 = arith.constant 0 : index
    %20 = vector.load %arg2[%c0_5, %c0_6] : memref<32x1xi32, #tpu.memory_space<vmem>>, vector<32x1xi32>
    %21 = arith.cmpi eq, %19, %20 : vector<32x1xi32>
    %22 = arith.extui %21 : vector<32x1xi1> to vector<32x1xi32>
    %23 = arith.sitofp %22 : vector<32x1xi32> to vector<32x1xf32>
    %24 = tpu.iota {dimensions = array<i32: 0>} : vector<32x1xi32>
    %c32_i32 = arith.constant 32 : i32
    %25 = arith.muli %arg0, %c32_i32 : i32
    %26 = vector.broadcast %25 : i32 to vector<32x1xi32>
    %27 = arith.addi %26, %24 : vector<32x1xi32>
    %c100_i32 = arith.constant 100 : i32
    %28 = vector.broadcast %c100_i32 : i32 to vector<32x1xi32>
    %29 = arith.cmpi slt, %27, %28 : vector<32x1xi32>
    %cst_7 = arith.constant 0.000000e+00 : f32
    %30 = vector.broadcast %cst_7 : f32 to vector<32x1xf32>
    %31 = arith.select %29, %12, %30 : vector<32x1xi1>, vector<32x1xf32>
    %cst_8 = arith.constant 0.000000e+00 : f32
    %32 = vector.broadcast %cst_8 : f32 to vector<32x1xf32>
    %33 = arith.select %29, %23, %32 : vector<32x1xi1>, vector<32x1xf32>
    %34 = tpu.iota {dimensions = array<i32: 1>} : vector<32x128xi32>
    %35 = arith.sitofp %34 : vector<32x128xi32> to vector<32x128xf32>
    %cst_9 = arith.constant 1.500000e+01 : f32
    %36 = vector.broadcast %cst_9 : f32 to vector<32x128xf32>
    %37 = arith.divf %35, %36 : vector<32x128xf32>
    %cst_10 = arith.constant 1.000000e+00 : f32
    %38 = vector.broadcast %cst_10 : f32 to vector<32x128xf32>
    %39 = arith.addf %35, %38 : vector<32x128xf32>
    %cst_11 = arith.constant 1.500000e+01 : f32
    %40 = vector.broadcast %cst_11 : f32 to vector<32x128xf32>
    %41 = arith.divf %39, %40 : vector<32x128xf32>
    %42 = vector.broadcast %31 : vector<32x1xf32> to vector<32x128xf32>
    %43 = arith.cmpf ogt, %42, %37 : vector<32x128xf32>
    %44 = vector.broadcast %31 : vector<32x1xf32> to vector<32x128xf32>
    %45 = arith.cmpf ole, %44, %41 : vector<32x128xf32>
    %46 = arith.andi %43, %45 : vector<32x128xi1>
    %c15_i32 = arith.constant 15 : i32
    %47 = vector.broadcast %c15_i32 : i32 to vector<32x128xi32>
    %48 = arith.cmpi slt, %34, %47 : vector<32x128xi32>
    %49 = arith.andi %46, %48 : vector<32x128xi1>
    %50 = vector.broadcast %29 : vector<32x1xi1> to vector<32x128xi1>
    %51 = arith.andi %49, %50 : vector<32x128xi1>
    %52 = arith.extui %51 : vector<32x128xi1> to vector<32x128xi32>
    %53 = arith.sitofp %52 : vector<32x128xi32> to vector<32x128xf32>
    %c0_12 = arith.constant 0 : index
    %c0_13 = arith.constant 0 : index
    %54 = vector.load %arg4[%c0_12, %c0_13] : memref<1x128xf32, #tpu.memory_space<vmem>>, vector<1x128xf32>
    %cst_14 = arith.constant dense<0.000000e+00> : vector<128xf32>
    %55 = vector.multi_reduction <add>, %53, %cst_14 [0] : vector<32x128xf32> to vector<128xf32>
    %56 = vector.shape_cast %55 : vector<128xf32> to vector<1x128xf32>
    %57 = arith.addf %54, %56 : vector<1x128xf32>
    %c0_15 = arith.constant 0 : index
    %c0_16 = arith.constant 0 : index
    %58 = vector.load %arg4[%c0_15, %c0_16] : memref<1x128xf32, #tpu.memory_space<vmem>>, vector<1x128xf32>
    tpu.vector_store %arg4[%c0_15, %c0_16], %57 {strides = array<i32>} : memref<1x128xf32, #tpu.memory_space<vmem>>, vector<1x128xf32>,
    %c0_17 = arith.constant 0 : index
    %c0_18 = arith.constant 0 : index
    %59 = vector.load %arg5[%c0_17, %c0_18] : memref<1x128xf32, #tpu.memory_space<vmem>>, vector<1x128xf32>
    %60 = vector.broadcast %31 : vector<32x1xf32> to vector<32x128xf32>
    %61 = arith.mulf %53, %60 : vector<32x128xf32>
    %cst_19 = arith.constant dense<0.000000e+00> : vector<128xf32>
    %62 = vector.multi_reduction <add>, %61, %cst_19 [0] : vector<32x128xf32> to vector<128xf32>
    %63 = vector.shape_cast %62 : vector<128xf32> to vector<1x128xf32>
    %64 = arith.addf %59, %63 : vector<1x128xf32>
    %c0_20 = arith.constant 0 : index
    %c0_21 = arith.constant 0 : index
    %65 = vector.load %arg5[%c0_20, %c0_21] : memref<1x128xf32, #tpu.memory_space<vmem>>, vector<1x128xf32>
    tpu.vector_store %arg5[%c0_20, %c0_21], %64 {strides = array<i32>} : memref<1x128xf32, #tpu.memory_space<vmem>>, vector<1x128xf32>,
    %c0_22 = arith.constant 0 : index
    %c0_23 = arith.constant 0 : index
    %66 = vector.load %arg6[%c0_22, %c0_23] : memref<1x128xf32, #tpu.memory_space<vmem>>, vector<1x128xf32>
    %67 = vector.broadcast %33 : vector<32x1xf32> to vector<32x128xf32>
    %68 = arith.mulf %53, %67 : vector<32x128xf32>
    %cst_24 = arith.constant dense<0.000000e+00> : vector<128xf32>
    %69 = vector.multi_reduction <add>, %68, %cst_24 [0] : vector<32x128xf32> to vector<128xf32>
    %70 = vector.shape_cast %69 : vector<128xf32> to vector<1x128xf32>
    %71 = arith.addf %66, %70 : vector<1x128xf32>
    %c0_25 = arith.constant 0 : index
    %c0_26 = arith.constant 0 : index
    %72 = vector.load %arg6[%c0_25, %c0_26] : memref<1x128xf32, #tpu.memory_space<vmem>>, vector<1x128xf32>
    tpu.vector_store %arg6[%c0_25, %c0_26], %71 {strides = array<i32>} : memref<1x128xf32, #tpu.memory_space<vmem>>, vector<1x128xf32>,
    %c3_i32 = arith.constant 3 : i32
    %73 = arith.cmpi eq, %arg0, %c3_i32 : i32
    %74 = arith.extui %73 : i1 to i32
    %c0_i32_27 = arith.constant 0 : i32
    %75 = arith.cmpi ne, %74, %c0_i32_27 : i32
    scf.if %75 {
      %c0_28 = arith.constant 0 : index
      %c0_29 = arith.constant 0 : index
      %76 = vector.load %arg4[%c0_28, %c0_29] : memref<1x128xf32, #tpu.memory_space<vmem>>, vector<1x128xf32>
      %cst_30 = arith.constant 1.000000e+00 : f32
      %77 = vector.broadcast %cst_30 : f32 to vector<1x128xf32>
      %78 = arith.maximumf %76, %77 : vector<1x128xf32>
      %cst_31 = arith.constant 1.000000e+02 : f32
      %79 = vector.broadcast %cst_31 : f32 to vector<1x128xf32>
      %80 = arith.divf %76, %79 : vector<1x128xf32>
      %c0_32 = arith.constant 0 : index
      %c0_33 = arith.constant 0 : index
      %81 = vector.load %arg5[%c0_32, %c0_33] : memref<1x128xf32, #tpu.memory_space<vmem>>, vector<1x128xf32>
      %82 = arith.divf %81, %78 : vector<1x128xf32>
      %c0_34 = arith.constant 0 : index
      %c0_35 = arith.constant 0 : index
      %83 = vector.load %arg6[%c0_34, %c0_35] : memref<1x128xf32, #tpu.memory_space<vmem>>, vector<1x128xf32>
      %84 = arith.divf %83, %78 : vector<1x128xf32>
      %85 = arith.subf %82, %84 : vector<1x128xf32>
      %86 = math.absf %85 : vector<1x128xf32>
      %87 = arith.mulf %86, %80 : vector<1x128xf32>
      %cst_36 = arith.constant 0.000000e+00 : f32
      %88 = vector.broadcast %cst_36 : f32 to vector<1x128xf32>
      %89 = arith.cmpf ogt, %76, %88 : vector<1x128xf32>
      %cst_37 = arith.constant 0.000000e+00 : f32
      %90 = vector.broadcast %cst_37 : f32 to vector<1x128xf32>
      %91 = arith.select %89, %87, %90 : vector<1x128xi1>, vector<1x128xf32>
      %92 = vector.shape_cast %91 : vector<1x128xf32> to vector<1x1x128xf32>
      %cst_38 = arith.constant dense<0.000000e+00> : vector<1xf32>
      %93 = vector.multi_reduction <add>, %92, %cst_38 [1, 2] : vector<1x1x128xf32> to vector<1xf32>
      %94 = vector.shape_cast %93 : vector<1xf32> to vector<1x1x1xf32>
      %95 = vector.extract %94[0, 0, 0] : f32 from vector<1x1x1xf32>
      %96 = vector.broadcast %95 : f32 to vector<1x1xf32>
      %c0_39 = arith.constant 0 : index
      %c0_40 = arith.constant 0 : index
      %97 = vector.load %arg3[%c0_39, %c0_40] : memref<1x1xf32, #tpu.memory_space<vmem>>, vector<1x1xf32>
      tpu.vector_store %arg3[%c0_39, %c0_40], %96 {strides = array<i32>} : memref<1x1xf32, #tpu.memory_space<vmem>>, vector<1x1xf32>,
    } else {
    }
    return
  }
  func.func @transform_0(%arg0: i32) -> (i32, i32) {
    %c0_i32 = arith.constant 0 : i32
    %c0_i32_0 = arith.constant 0 : i32
    return %arg0, %c0_i32 : i32, i32
  }
  func.func @transform_1(%arg0: i32) -> (i32, i32) {
    %c0_i32 = arith.constant 0 : i32
    %c0_i32_0 = arith.constant 0 : i32
    return %arg0, %c0_i32 : i32, i32
  }
  func.func @transform_2(%arg0: i32) -> (i32, i32) {
    %c0_i32 = arith.constant 0 : i32
    %c0_i32_0 = arith.constant 0 : i32
    %c0_i32_1 = arith.constant 0 : i32
    return %c0_i32, %c0_i32_0 : i32, i32
  }
}

</mosaic_0001>

<llo_original>
// kernel: tpu_custom_call.1
$region0: #{tpu_custom_call.1}
  #allocation0 [shape = 'u32[]', space=smem, size = 0x4, offset = 0x4, fixed_abs, tag = 'smem constant byte address 0x4 - core index']
  #allocation1 [shape = 'u32[144,128]{1,0:T(1,128)}', space=vmem, size = 0x12000, scoped, tag = 'internal scratch']
  #allocation2 [shape = 'f32[1,128]{1,0:T(1,128)}', space=vmem, size = 0x200, scoped, tag = 'scratch operand']
  #allocation3 [shape = 'f32[1,128]{1,0:T(1,128)}', space=vmem, size = 0x200, scoped, tag = 'scratch operand']
  #allocation4 [shape = 'f32[1,128]{1,0:T(1,128)}', space=vmem, size = 0x200, scoped, tag = 'scratch operand']
  %s0 = inlined_call_operand.vmem [shape: f32[100,16], index: 0, kind: input, shape index: {}]
  %s1 = inlined_call_operand.vmem [shape: s32[100,1], index: 1, kind: input, shape index: {}]
  %s2 = inlined_call_operand.hbm [shape: f32[1,1], index: 2, kind: output, shape index: {}]
  %s3 = sld [smem:[#allocation0]]
  $region49: #{tpu_custom_call.1} parent=0
    _
  %s5 = ssub.s32 1, %s3
  %s6 = scalar_select 0, %s5, %s3
  $region1: #{tpu_custom_call.1} parent=0
    #allocation5 [shape = 'u8[512]{0}', space=vmem, size = 0x400, scoped, tag = 'output window, operand 0, single buffered']
    #allocation6 [shape = 's32[2]{0}', space=sflag, size = 0x8, scoped, tag = 'scoped memory for tpu_custom_call.1']
    %7 = vsyncpa [#allocation6], 0
    loop: start=0, step=1, limit=6
    $region2: #{tpu_custom_call.1} parent=1 // loop_pre_header
      _
    $region3: #{tpu_custom_call.1} parent=1 // loop_header
      %s9 = sphi 0, %s13
      %p10 = scmp.ge.s32.totalorder %s9, 6
      %s19 = sphi 0, %s21
      %s22 = sphi 0, %s19
      %s23 = sphi 0, %s22
      %s39 = sphi 0, %s23
      %s45 = sphi 0, %s47
      %s48 = sphi 0, %s45
      %s49 = sphi 0, %s48
      %s65 = sphi 0, %s49
      %s69 = sphi 0, %s69
      %s71 = sphi 0, %s69
      %s72 = sphi 0, %s71
      %s86 = sphi 0, %s72
    $region4: #{tpu_custom_call.1} parent=1 // loop_header_branch
      %12 = sbr.rel (%p10) target = $region8
    $region5: #{tpu_custom_call.1} parent=1 // loop_body
      %s14 = ssub.s32 %s9, 1
      %s15 = ssub.s32 %s9, 2
      %s16 = sadd.s32 %s9, 1
      %s17 = ssub.s32 %s9, %s16
      %p18 = scmp.eq.s32.totalorder %s17, 0
      %s20 = sadd.s32 %s19, 1
      %s21 = scalar_select %p18, %s19, %s20
      %p24 = pneg %p18
      %p25 = scmp.eq.s32.totalorder %s9, 3
      %p26 = por %p24, %p25
      %p27 = scmp.ne.s32.totalorder %s19, %s22
      %p28 = scmp.eq.s32.totalorder %s9, 0
      %p29 = por %p27, %p28
      %p30 = scmp.ne.s32.totalorder %s19, %s22
      %p31 = scmp.eq.s32.totalorder %s14, 3
      %p32 = por %p30, %p31
      %p33 = scmp.ne.s32.totalorder %s22, %s23
      %p34 = scmp.eq.s32.totalorder %s14, 0
      %p35 = por %p33, %p34
      %p36 = scmp.ne.s32.totalorder %s22, %s23
      %p37 = scmp.eq.s32.totalorder %s15, 3
      %p38 = por %p36, %p37
      %p40 = scmp.ne.s32.totalorder %s23, %s39
      %p41 = scmp.eq.s32.totalorder %s15, 0
      %p42 = por %p40, %p41
      %s43 = ssub.s32 %s9, %s16
      %p44 = scmp.eq.s32.totalorder %s43, 0
      %s46 = sadd.s32 %s45, 1
      %s47 = scalar_select %p44, %s45, %s46
      %p50 = pneg %p44
      %p51 = scmp.eq.s32.totalorder %s9, 3
      %p52 = por %p50, %p51
      %p53 = scmp.ne.s32.totalorder %s45, %s48
      %p54 = scmp.eq.s32.totalorder %s9, 0
      %p55 = por %p53, %p54
      %p56 = scmp.ne.s32.totalorder %s45, %s48
      %p57 = scmp.eq.s32.totalorder %s14, 3
      %p58 = por %p56, %p57
      %p59 = scmp.ne.s32.totalorder %s48, %s49
      %p60 = scmp.eq.s32.totalorder %s14, 0
      %p61 = por %p59, %p60
      %p62 = scmp.ne.s32.totalorder %s48, %s49
      %p63 = scmp.eq.s32.totalorder %s15, 3
      %p64 = por %p62, %p63
      %p66 = scmp.ne.s32.totalorder %s49, %s65
      %p67 = scmp.eq.s32.totalorder %s15, 0
      %p68 = por %p66, %p67
      %s70 = sadd.s32 %s69, 1
      %p73 = scmp.eq.s32.totalorder %s9, 3
      %p74 = scmp.ne.s32.totalorder %s69, %s71
      %p75 = scmp.eq.s32.totalorder %s9, 0
      %p76 = por %p74, %p75
      %p77 = scmp.ne.s32.totalorder %s69, %s71
      %p78 = scmp.eq.s32.totalorder %s14, 3
      %p79 = por %p77, %p78
      %p80 = scmp.ne.s32.totalorder %s71, %s72
      %p81 = scmp.eq.s32.totalorder %s14, 0
      %p82 = por %p80, %p81
      %p83 = scmp.ne.s32.totalorder %s71, %s72
      %p84 = scmp.eq.s32.totalorder %s15, 3
      %p85 = por %p83, %p84
      %p87 = scmp.ne.s32.totalorder %s72, %s86
      %p88 = scmp.eq.s32.totalorder %s15, 0
      %p89 = por %p87, %p88
      %p90 = scmp.le.s32.totalorder 1, %s9
      %p91 = scmp.lt.s32.totalorder %s9, 5
      %p92 = pnand %p90, %p91
      %p93 = pneg %p92
      // Predicated region
      $region9: #{tpu_custom_call.1} parent=5 // pred_check
        _
      $region10: #{tpu_custom_call.1} parent=5 // pred_check_branch
        %95 = sbr.rel (%p92) target = $region12
      $region11: #{tpu_custom_call.1} parent=5 // pred_region
        %s96 = ssub.s32 %s9, 1
      $region12: #{tpu_custom_call.1} parent=5 // pred_fallthru
        _
      %p97 = scmp.lt.s32.totalorder %s9, 4
      // Predicated region
      $region13: #{tpu_custom_call.1} parent=5 // pred_check
        %p98 = pneg %p97
      $region14: #{tpu_custom_call.1} parent=5 // pred_check_branch
        %100 = sbr.rel (%p98) target = $region16
      $region15: #{tpu_custom_call.1} parent=5 // pred_region
        // Predicated region
        $region17: #{tpu_custom_call.1} parent=15 // pred_check
          %p101 = pneg %p29
        $region18: #{tpu_custom_call.1} parent=15 // pred_check_branch
          %103 = sbr.rel (%p101) target = $region20
        $region19: #{tpu_custom_call.1} parent=15 // pred_region
          %s104 = smul.u32 4, %s9
          %s105 = ssub.s32 13, %s104
          %p106 = scmp.lt.s32.totalorder %s105, 4
          %s107 = scalar_select %p106, %s105, 4
          %s108 = smul.u32 128, %s107
          %p109 = scmp.lt.s32.totalorder %s104, 12
          %s110 = scalar_select %p109, %s104, 12
          %s111 = smul.addr %s110, 8
          %s112 = scalar_lea.vmem %s0, %s111
          %s113 = smul.u32 4, %s9
          %s114 = ssub.s32 13, %s113
          %p115 = scmp.lt.s32.totalorder %s114, 4
          %s116 = scalar_select %p115, %s114, 4
          %s117 = smul.u32 128, %s116
        $region20: #{tpu_custom_call.1} parent=15 // pred_fallthru
          _
        // Predicated region
        $region21: #{tpu_custom_call.1} parent=15 // pred_check
          %p118 = pneg %p55
        $region22: #{tpu_custom_call.1} parent=15 // pred_check_branch
          %120 = sbr.rel (%p118) target = $region24
        $region23: #{tpu_custom_call.1} parent=15 // pred_region
          %s121 = smul.u32 4, %s9
          %s122 = ssub.s32 13, %s121
          %p123 = scmp.lt.s32.totalorder %s122, 4
          %s124 = scalar_select %p123, %s122, 4
          %s125 = smul.u32 128, %s124
          %p126 = scmp.lt.s32.totalorder %s121, 12
          %s127 = scalar_select %p126, %s121, 12
          %s128 = smul.addr %s127, 8
          %s129 = scalar_lea.vmem %s1, %s128
          %s130 = smul.u32 4, %s9
          %s131 = ssub.s32 13, %s130
          %p132 = scmp.lt.s32.totalorder %s131, 4
          %s133 = scalar_select %p132, %s131, 4
          %s134 = smul.u32 128, %s133
        $region24: #{tpu_custom_call.1} parent=15 // pred_fallthru
          _
      $region16: #{tpu_custom_call.1} parent=5 // pred_fallthru
        _
      %p135 = scmp.le.s32.totalorder 1, %s9
      %p136 = scmp.lt.s32.totalorder %s9, 5
      %p137 = pnand %p135, %p136
      %p138 = pneg %p137
      // Predicated region
      $region25: #{tpu_custom_call.1} parent=5 // pred_check
        _
      $region26: #{tpu_custom_call.1} parent=5 // pred_check_branch
        %140 = sbr.rel (%p137) target = $region28
      $region27: #{tpu_custom_call.1} parent=5 // pred_region
        %s141 = ssub.s32 %s9, 1
        %s142 = smul.u32 4, %s14
        %s143 = ssub.s32 13, %s142
        %p144 = scmp.lt.s32.totalorder %s143, 4
        %s145 = scalar_select %p144, %s143, 4
        %s146 = smul.u32 128, %s145
        %p147 = scmp.lt.s32.totalorder %s142, 12
        %s148 = scalar_select %p147, %s142, 12
        %s149 = smul.addr %s148, 8
        %s150 = scalar_lea.vmem %s0, %s149
        %p151 = pneg %p35
        %p152 = pneg %p32
        %s153 = smul.u32 4, %s14
        %s154 = ssub.s32 13, %s153
        %p155 = scmp.lt.s32.totalorder %s154, 4
        %s156 = scalar_select %p155, %s154, 4
        %s157 = smul.u32 128, %s156
        %p158 = scmp.lt.s32.totalorder %s153, 12
        %s159 = scalar_select %p158, %s153, 12
        %s160 = smul.addr %s159, 8
        %s161 = scalar_lea.vmem %s1, %s160
        %p162 = pneg %p61
        %p163 = pneg %p58
        %p164 = pneg %p82
        %p165 = pneg %p79
        %s166 = smul.u32 4, %s14
        %s167 = ssub.s32 13, %s166
        %p168 = scmp.lt.s32.totalorder %s167, 4
        %s169 = scalar_select %p168, %s167, 4
        %s170 = smul.u32 128, %s169
        %p171 = scmp.lt.s32.totalorder %s166, 12
        %s172 = scalar_select %p171, %s166, 12
        %s173 = smul.addr %s172, 8
        %s174 = scalar_lea.vmem %s0, %s173
        %s175 = smul.u32 4, %s14
        %s176 = ssub.s32 13, %s175
        %p177 = scmp.lt.s32.totalorder %s176, 4
        %s178 = scalar_select %p177, %s176, 4
        %s179 = smul.u32 128, %s178
        %s180 = smul.u32 4, %s14
        %s181 = ssub.s32 13, %s180
        %p182 = scmp.lt.s32.totalorder %s181, 4
        %s183 = scalar_select %p182, %s181, 4
        %s184 = smul.u32 128, %s183
        %p185 = scmp.lt.s32.totalorder %s180, 12
        %s186 = scalar_select %p185, %s180, 12
        %s187 = smul.addr %s186, 8
        %s188 = scalar_lea.vmem %s1, %s187
        %s189 = smul.u32 4, %s14
        %s190 = ssub.s32 13, %s189
        %p191 = scmp.lt.s32.totalorder %s190, 4
        %s192 = scalar_select %p191, %s190, 4
        %s193 = smul.u32 128, %s192
        %p194 = scmp.eq.s32.totalorder %s14, 0
        // Predicated region
        $region29: #{tpu_custom_call.1} parent=27 // pred_check
          %p195 = pneg %p194
        $region30: #{tpu_custom_call.1} parent=27 // pred_check_branch
          %197 = sbr.rel (%p195) target = $region32
        $region31: #{tpu_custom_call.1} parent=27 // pred_region
          %198 = vst [vmem:[#allocation2] sm:$0x1] 0.0
          %199 = vst [vmem:[#allocation3] sm:$0x1] 0.0
          %200 = vst [vmem:[#allocation4] sm:$0x1] 0.0
        $region32: #{tpu_custom_call.1} parent=27 // pred_fallthru
          _
        %v201 = vld [vmem:[%s174] sm:$0xff]
        %v202 = vld [vmem:[%s174 + $0x8] sm:$0xff]
        %v203 = vld [vmem:[%s174 + $0x10] sm:$0xff]
        %v204 = vld [vmem:[%s174 + $0x18] sm:$0xff]
        %vm205 = vcmask 130048
        %v206 = vsel %vm205, %v201, -inf
        %207 = vmax.xlane.f32.xlu0 %v206
        %v208 = vpop.xlane.xlu0 %207
        %v209 = vsel %vm205, %v202, -inf
        %210 = vmax.xlane.f32.xlu0 %v209
        %v211 = vpop.xlane.xlu0 %210
        %v212 = vsel %vm205, %v203, -inf
        %213 = vmax.xlane.f32.xlu0 %v212
        %v214 = vpop.xlane.xlu0 %213
        %v215 = vsel %vm205, %v204, -inf
        %216 = vmax.xlane.f32.xlu0 %v215
        %v217 = vpop.xlane.xlu0 %216
        %v218 = vsub.f32 %v201, %v208
        %v219 = vsub.f32 %v202, %v211
        %v220 = vsub.f32 %v203, %v214
        %v221 = vsub.f32 %v204, %v217
        %v222 = vmul.f32 %v218, 1.442695
        %v223 = vpow.pop %v222
        %v224 = vmul.f32 %v219, 1.442695
        %v225 = vpow.pop %v224
        %v226 = vmul.f32 %v220, 1.442695
        %v227 = vpow.pop %v226
        %v228 = vmul.f32 %v221, 1.442695
        %v229 = vpow.pop %v228
        %v230 = vsel %vm205, %v223, 0.0
        %231 = vadd.xlane.f32.xlu0 %v230
        %v232 = vpop.xlane.xlu0 %231
        %v233 = vsel %vm205, %v225, 0.0
        %234 = vadd.xlane.f32.xlu0 %v233
        %v235 = vpop.xlane.xlu0 %234
        %v236 = vsel %vm205, %v227, 0.0
        %237 = vadd.xlane.f32.xlu0 %v236
        %v238 = vpop.xlane.xlu0 %237
        %v239 = vsel %vm205, %v229, 0.0
        %240 = vadd.xlane.f32.xlu0 %v239
        %v241 = vpop.xlane.xlu0 %240
        %v242 = vrcp.pop %v232
        %v243 = vmul.f32 1.0, %v242
        %v244 = vrcp.pop %v235
        %v245 = vmul.f32 1.0, %v244
        %v246 = vrcp.pop %v238
        %v247 = vmul.f32 1.0, %v246
        %v248 = vrcp.pop %v241
        %v249 = vmul.f32 1.0, %v248
        %v250 = vlaneseq
        %v251 = vand.u32 %v250, 127
        %vm252 = vcmp.eq.f32.partialorder %v201, %v208
        %vm253 = vcmp.eq.f32.partialorder %v202, %v211
        %vm254 = vcmp.eq.f32.partialorder %v203, %v214
        %vm255 = vcmp.eq.f32.partialorder %v204, %v217
        %v256 = vsel %vm252, %v251, 16
        %v257 = vsel %vm253, %v251, 16
        %v258 = vsel %vm254, %v251, 16
        %v259 = vsel %vm255, %v251, 16
        %v260 = vsel %vm205, %v256, 2147483647
        %v261 = vand.u32 %v260, 65535
        %v262 = vshra.s32 %v260, 16
        %v263 = vcvt.s32.f32 %v261
        %v264 = vcvt.s32.f32 %v262
        %265 = vmin.xlane.f32.xlu0 %v264
        %v266 = vpop.xlane.xlu0 %265
        %vm267 = vcmp.eq.f32.partialorder %v264, %v266
        %v268 = vsel %vm267, %v263, inf
        %269 = vmin.xlane.f32.xlu0 %v268
        %v270 = vpop.xlane.xlu0 %269
        %v271 = vcvt.f32.s32 %v270
        %v272 = vcvt.f32.s32 %v266
        %v273 = vshll.u32 %v272, 16
        %v274 = vadd.s32 %v273, %v271
        %v275 = vsel %vm205, %v257, 2147483647
        %v276 = vand.u32 %v275, 65535
        %v277 = vshra.s32 %v275, 16
        %v278 = vcvt.s32.f32 %v276
        %v279 = vcvt.s32.f32 %v277
        %280 = vmin.xlane.f32.xlu0 %v279
        %v281 = vpop.xlane.xlu0 %280
        %vm282 = vcmp.eq.f32.partialorder %v279, %v281
        %v283 = vsel %vm282, %v278, inf
        %284 = vmin.xlane.f32.xlu0 %v283
        %v285 = vpop.xlane.xlu0 %284
        %v286 = vcvt.f32.s32 %v285
        %v287 = vcvt.f32.s32 %v281
        %v288 = vshll.u32 %v287, 16
        %v289 = vadd.s32 %v288, %v286
        %v290 = vsel %vm205, %v258, 2147483647
        %v291 = vand.u32 %v290, 65535
        %v292 = vshra.s32 %v290, 16
        %v293 = vcvt.s32.f32 %v291
        %v294 = vcvt.s32.f32 %v292
        %295 = vmin.xlane.f32.xlu0 %v294
        %v296 = vpop.xlane.xlu0 %295
        %vm297 = vcmp.eq.f32.partialorder %v294, %v296
        %v298 = vsel %vm297, %v293, inf
        %299 = vmin.xlane.f32.xlu0 %v298
        %v300 = vpop.xlane.xlu0 %299
        %v301 = vcvt.f32.s32 %v300
        %v302 = vcvt.f32.s32 %v296
        %v303 = vshll.u32 %v302, 16
        %v304 = vadd.s32 %v303, %v301
        %v305 = vsel %vm205, %v259, 2147483647
        %v306 = vand.u32 %v305, 65535
        %v307 = vshra.s32 %v305, 16
        %v308 = vcvt.s32.f32 %v306
        %v309 = vcvt.s32.f32 %v307
        %310 = vmin.xlane.f32.xlu0 %v309
        %v311 = vpop.xlane.xlu0 %310
        %vm312 = vcmp.eq.f32.partialorder %v309, %v311
        %v313 = vsel %vm312, %v308, inf
        %314 = vmin.xlane.f32.xlu0 %v313
        %v315 = vpop.xlane.xlu0 %314
        %v316 = vcvt.f32.s32 %v315
        %v317 = vcvt.f32.s32 %v311
        %v318 = vshll.u32 %v317, 16
        %v319 = vadd.s32 %v318, %v316
        %v320 = vld [vmem:[%s188] sm:$0xff]
        %v321 = vld [vmem:[%s188 + $0x8] sm:$0xff]
        %v322 = vld [vmem:[%s188 + $0x10] sm:$0xff]
        %v323 = vld [vmem:[%s188 + $0x18] sm:$0xff]
        %vm324 = vcmp.eq.s32.totalorder %v274, %v320
        %vm325 = vcmp.eq.s32.totalorder %v289, %v321
        %vm326 = vcmp.eq.s32.totalorder %v304, %v322
        %vm327 = vcmp.eq.s32.totalorder %v319, %v323
        %v328 = vsel %vm324, 1, 0
        %v329 = vsel %vm325, 1, 0
        %v330 = vsel %vm326, 1, 0
        %v331 = vsel %vm327, 1, 0
        %v332 = vcvt.s32.f32 %v328
        %v333 = vcvt.s32.f32 %v329
        %v334 = vcvt.s32.f32 %v330
        %v335 = vcvt.s32.f32 %v331
        %v336 = vlaneseq
        %v337 = vshrl.u32 %v336, 7
        %v338 = vadd.s32 %v337, 8
        %v339 = vadd.s32 %v337, 16
        %v340 = vadd.s32 %v337, 24
        %s341 = smul.u32 %s14, 32
        %v342 = vstv %s341
        %v343 = vadd.s32 %v342, %v337
        %v344 = vadd.s32 %v342, %v338
        %v345 = vadd.s32 %v342, %v339
        %v346 = vadd.s32 %v342, %v340
        %vm347 = vcmp.lt.s32.totalorder %v343, 100
        %vm348 = vcmp.lt.s32.totalorder %v344, 100
        %vm349 = vcmp.lt.s32.totalorder %v345, 100
        %vm350 = vcmp.lt.s32.totalorder %v346, 100
        %v351 = vsel %vm347, %v243, 0.0
        %v352 = vsel %vm348, %v245, 0.0
        %v353 = vsel %vm349, %v247, 0.0
        %v354 = vsel %vm350, %v249, 0.0
        %v355 = vsel %vm347, %v332, 0.0
        %v356 = vsel %vm348, %v333, 0.0
        %v357 = vsel %vm349, %v334, 0.0
        %v358 = vsel %vm350, %v335, 0.0
        %v359 = vcvt.s32.f32 %v251
        %v360 = vrcp.pop 15.0
        %v361 = vmul.f32 %v359, %v360
        %v362 = vadd.f32 %v359, 1.0
        %v363 = vmul.f32 %v362, %v360
        %vm364 = vcmp.gt.f32.partialorder %v351, %v361
        %vm365 = vcmp.gt.f32.partialorder %v352, %v361
        %vm366 = vcmp.gt.f32.partialorder %v353, %v361
        %vm367 = vcmp.gt.f32.partialorder %v354, %v361
        %vm368 = vcmp.le.f32.partialorder %v351, %v363
        %vm369 = vcmp.le.f32.partialorder %v352, %v363
        %vm370 = vcmp.le.f32.partialorder %v353, %v363
        %vm371 = vcmp.le.f32.partialorder %v354, %v363
        %vm372 = vmand %vm364, %vm368
        %vm373 = vmand %vm365, %vm369
        %vm374 = vmand %vm366, %vm370
        %vm375 = vmand %vm367, %vm371
        %vm376 = vcmp.lt.s32.totalorder %v251, 15
        %vm377 = vmand %vm372, %vm376
        %vm378 = vmand %vm373, %vm376
        %vm379 = vmand %vm374, %vm376
        %vm380 = vmand %vm375, %vm376
        %v381 = vsel %vm347, 1, 0
        %v382 = vsel %vm348, 1, 0
        %v383 = vsel %vm349, 1, 0
        %v384 = vsel %vm350, 1, 0
        %vm385 = vcmp.eq.s32.totalorder %v381, 1
        %vm386 = vcmp.eq.s32.totalorder %v382, 1
        %vm387 = vcmp.eq.s32.totalorder %v383, 1
        %vm388 = vcmp.eq.s32.totalorder %v384, 1
        %vm389 = vmand %vm377, %vm385
        %vm390 = vmand %vm378, %vm386
        %vm391 = vmand %vm379, %vm387
        %vm392 = vmand %vm380, %vm388
        %v393 = vsel %vm389, 1, 0
        %v394 = vsel %vm390, 1, 0
        %v395 = vsel %vm391, 1, 0
        %v396 = vsel %vm392, 1, 0
        %v397 = vcvt.s32.f32 %v393
        %v398 = vcvt.s32.f32 %v394
        %v399 = vcvt.s32.f32 %v395
        %v400 = vcvt.s32.f32 %v396
        %v401 = vld [vmem:[#allocation2] sm:$0x1]
        %v402 = vadd.f32 %v397, %v398
        %v403 = vadd.f32 %v402, %v399
        %v404 = vadd.f32 %v403, %v400
        %v405 = vrot.slane %v404, 4
        %v406 = vadd.f32 %v404, %v405
        %v407 = vrot.slane %v406, 2
        %v408 = vadd.f32 %v406, %v407
        %v409 = vrot.slane %v408, 1
        %v410 = vadd.f32 %v408, %v409
        %v411 = vadd.f32 %v401, %v410
        %412 = vst [vmem:[#allocation2] sm:$0x1] %v411
        %v413 = vld [vmem:[#allocation3] sm:$0x1]
        %v414 = vmul.f32 %v397, %v351
        %v415 = vmul.f32 %v398, %v352
        %v416 = vmul.f32 %v399, %v353
        %v417 = vmul.f32 %v400, %v354
        %v418 = vadd.f32 %v414, %v415
        %v419 = vadd.f32 %v418, %v416
        %v420 = vadd.f32 %v419, %v417
        %v421 = vrot.slane %v420, 4
        %v422 = vadd.f32 %v420, %v421
        %v423 = vrot.slane %v422, 2
        %v424 = vadd.f32 %v422, %v423
        %v425 = vrot.slane %v424, 1
        %v426 = vadd.f32 %v424, %v425
        %v427 = vadd.f32 %v413, %v426
        %428 = vst [vmem:[#allocation3] sm:$0x1] %v427
        %v429 = vld [vmem:[#allocation4] sm:$0x1]
        %431 = vset.pattern.permute.xlu0 0
        %432 = vperm.xlu0 %431, %v355
        %v433 = vpop.permute.xlu0 %432
        %436 = vset.pattern.permute.xlu0 0
        %437 = vperm.xlu0 %436, %v356
        %v438 = vpop.permute.xlu0 %437
        %441 = vset.pattern.permute.xlu0 0
        %442 = vperm.xlu0 %441, %v357
        %v443 = vpop.permute.xlu0 %442
        %446 = vset.pattern.permute.xlu0 0
        %447 = vperm.xlu0 %446, %v358
        %v448 = vpop.permute.xlu0 %447
        %v450 = vmul.f32 %v397, %v433
        %v451 = vmul.f32 %v398, %v438
        %v452 = vmul.f32 %v399, %v443
        %v453 = vmul.f32 %v400, %v448
        %v454 = vadd.f32 %v450, %v451
        %v455 = vadd.f32 %v454, %v452
        %v456 = vadd.f32 %v455, %v453
        %v457 = vrot.slane %v456, 4
        %v458 = vadd.f32 %v456, %v457
        %v459 = vrot.slane %v458, 2
        %v460 = vadd.f32 %v458, %v459
        %v461 = vrot.slane %v460, 1
        %v462 = vadd.f32 %v460, %v461
        %v463 = vadd.f32 %v429, %v462
        %464 = vst [vmem:[#allocation4] sm:$0x1] %v463
        %p465 = scmp.eq.s32.totalorder %s14, 3
        // Predicated region
        $region33: #{tpu_custom_call.1} parent=27 // pred_check
          %p466 = pneg %p465
        $region34: #{tpu_custom_call.1} parent=27 // pred_check_branch
          %468 = sbr.rel (%p466) target = $region36
        $region35: #{tpu_custom_call.1} parent=27 // pred_region
          %v469 = vld [vmem:[#allocation2] sm:$0x1]
          %v470 = vmax.f32 %v469, 1.0
          %v471 = vrcp.pop 100.0
          %v472 = vmul.f32 %v469, %v471
          %v473 = vld [vmem:[#allocation3] sm:$0x1]
          %v474 = vrcp.pop %v470
          %v475 = vmul.f32 %v473, %v474
          %v476 = vld [vmem:[#allocation4] sm:$0x1]
          %v477 = vmul.f32 %v476, %v474
          %v478 = vsub.f32 %v475, %v477
          %v479 = vand.u32 2147483647, %v478
          %v480 = vmul.f32 %v479, %v472
          %vm481 = vcmp.gt.f32.partialorder %v469, 0.0
          %v482 = vsel %vm481, %v480, 0.0
          %vm483 = vcmask 1040384
          %v484 = vsel %vm483, %v482, 0.0
          %485 = vadd.xlane.f32.xlu0 %v484
          %v486 = vpop.xlane.xlu0 %485
          %v487 = vrot.slane %v486, 4
          %v488 = vadd.f32 %v486, %v487
          %v489 = vrot.slane %v488, 2
          %v490 = vadd.f32 %v488, %v489
          %v491 = vrot.slane %v490, 1
          %v492 = vadd.f32 %v490, %v491
          %s493 = vtos %v492
          %v494 = vstv %s493
          %vm495 = vcmask 0
          %496 = vst.msk [vmem:[#allocation5] sm:$0x1] %vm495, %v494
        $region36: #{tpu_custom_call.1} parent=27 // pred_fallthru
          _
        // Predicated region
        $region37: #{tpu_custom_call.1} parent=27 // pred_check
          %p497 = pneg %p79
        $region38: #{tpu_custom_call.1} parent=27 // pred_check_branch
          %499 = sbr.rel (%p497) target = $region40
        $region39: #{tpu_custom_call.1} parent=27 // pred_region
          %s501 = ssub.s32 16, 16
          %502 = vsyncadd [#allocation6], %s501
          %s504 = sshll.u32 [#allocation5], 4
          %s505 = int_to_ptr.vmem [resolvable:$true] %s504
          %507 = dma.vmem_to_hbm [thread:$0]  %s505, 16, %s2, [#allocation6]
        $region40: #{tpu_custom_call.1} parent=27 // pred_fallthru
          _
        // Predicated region
        $region41: #{tpu_custom_call.1} parent=27 // pred_check
          %p508 = pneg %p79
        $region42: #{tpu_custom_call.1} parent=27 // pred_check_branch
          %510 = sbr.rel (%p508) target = $region44
        $region43: #{tpu_custom_call.1} parent=27 // pred_region
          %511 = dma.done [#allocation6], 16
        $region44: #{tpu_custom_call.1} parent=27 // pred_fallthru
          _
      $region28: #{tpu_custom_call.1} parent=5 // pred_fallthru
        _
      %p512 = scmp.le.s32.totalorder 2, %s9
      // Predicated region
      $region45: #{tpu_custom_call.1} parent=5 // pred_check
        %p513 = pneg %p512
      $region46: #{tpu_custom_call.1} parent=5 // pred_check_branch
        %515 = sbr.rel (%p513) target = $region48
      $region47: #{tpu_custom_call.1} parent=5 // pred_region
        %s516 = ssub.s32 %s9, 2
      $region48: #{tpu_custom_call.1} parent=5 // pred_fallthru
        _
    $region6: #{tpu_custom_call.1} parent=1 // loop_footer
      %s13 = sadd.s32 1, %s9
    $region7: #{tpu_custom_call.1} parent=1 // loop_footer_branch
      %8 = sbr.rel target = $region3
    $region8: #{tpu_custom_call.1} parent=1 // loop_exit
      _
    %517 = vsyncpa [#allocation6], 1
    %s518 = scalar_lea.sflag [#allocation6], 1
    %519 = vsyncpa %s518, 1

</llo_original>
